<compile_context>
chip_gen: v7x
topology: tpu7x:2x2x1
jax: 0.10.0
libtpu: 0.0.40
codegen_flags: <defaults>
</compile_context>

<pallas_src>
import functools
import warnings

import jax
import jax.numpy as jnp
from jax.experimental import pallas as pl
from jax.experimental.pallas import tpu as pltpu

# Donation-fallback warnings only (harmless); keep stdout/stderr clean.
warnings.filterwarnings("ignore", message=".*donat.*")


def _round_up(n, m):
    return (n + m - 1) // m * m


def _num_tensorcores_per_chip():
    """Best-effort TC-per-chip detection (v7x has 2, v5e/v6e have 1)."""
    try:
        kind = jax.devices()[0].device_kind.lower()
    except Exception:
        return 1
    return 2 if "v7" in kind else 1


def _choose_row_block(rows, T, n_tc):
    """Row-block size for the streaming kernel.

    ~4 MiB blocks (double-buffered in+out ~= 16 MiB VMEM) sit near the HBM
    roofline on single-TC chips; on 2-TC chips also keep >= 2 grid steps per
    TensorCore so each core's double-buffering actually overlaps.
    """
    if rows <= 8:
        return rows  # block dim == full array dim (always legal)
    row_bytes = T * 4
    target_block_bytes = 4 << 20
    r_blk = max(8, (target_block_bytes // max(row_bytes, 1)) // 8 * 8)
    r_blk = min(r_blk, _round_up(rows, 8))
    if n_tc >= 2:
        min_steps = 2 * n_tc
        per_step = max(8, (-(-rows // min_steps)) // 8 * 8)
        r_blk = min(r_blk, per_step)
    return r_blk


def _scale_clamp_kernel(x_ref, s_ref, o_ref, *, clamp, clamp_lim):
    """Streamed per-row affine transform + clamp.

    x_ref : (r_blk, T)  raw MEG rows (one row = one (batch, channel) pair)
    s_ref : (r_blk, 2)  column 0 = robust median (baseline fold), column 1 = 1/IQR
    o_ref : (r_blk, T)  output (aliases the input buffer)
    """
    off = s_ref[:, 0:1]
    inv = s_ref[:, 1:2]
    out = (x_ref[...] - off) * inv
    if clamp:
        out = jnp.clip(out, -clamp_lim, clamp_lim)
    o_ref[...] = out


@functools.partial(
    jax.jit,
    static_argnames=("baseline_len_samp", "clamp", "clamp_lim", "n_tc"),
    donate_argnums=(0,))
def _baseline_robust_scale(X, *, baseline_len_samp, clamp, clamp_lim, n_tc):
    """baseline_correction_single + scaleAndClamp on X:(B, C, T) float32."""
    B, C, T = X.shape
    rows = B * C
    X2 = X.reshape(rows, T)  # free bitcast (X is float32, contiguous)

    # --- per-row robust statistics in plain JAX -------------------------------
    # TODO(synk): jnp.quantile (sort/selection) has no clean Pallas TPU lowering;
    # the stats pass stays in XLA.  The baseline mean (over the first
    # `baseline_len_samp` samples) is a per-row constant, so it cancels exactly
    # against the RobustScaler median-centering; only median(x) and IQR(x) are
    # needed.  Single stacked quantile call -> one sort over the time axis.
    _ = baseline_len_samp  # cancels analytically; kept for signature fidelity
    q = jnp.quantile(
        X2, jnp.array([0.25, 0.5, 0.75], jnp.float32), axis=-1
    ).astype(jnp.float32)                                  # (3, rows)
    q25, med, q75 = q[0], q[1], q[2]
    iqr = q75 - q25
    inv_scale = 1.0 / jnp.where(iqr == 0.0, 1.0, iqr)      # sklearn: zero IQR -> 1.0
    stats = jnp.stack([med, inv_scale], axis=1).astype(jnp.float32)   # (rows, 2)

    # --- tile geometry --------------------------------------------------------
    r_blk = _choose_row_block(rows, T, n_tc)
    grid = (pl.cdiv(rows, r_blk),)

    # Block last dim == full T (legal regardless of the 128-divisibility rule);
    # Pallas handles the ragged last row-block, so no padded copy of X is made.
    x_spec = pl.BlockSpec((r_blk, T), lambda r: (r, 0))
    s_spec = pl.BlockSpec((r_blk, 2), lambda r: (r, 0))

    out = pl.pallas_call(
        functools.partial(_scale_clamp_kernel,
                          clamp=bool(clamp), clamp_lim=float(clamp_lim)),
        out_shape=jax.ShapeDtypeStruct((rows, T), jnp.float32),
        grid_spec=pltpu.PrefetchScalarGridSpec(
            num_scalar_prefetch=0,
            grid=grid,
            in_specs=[x_spec, s_spec],
            out_specs=x_spec,
        ),
        # X is read exactly once per block and the jit parameter is donated,
        # so the alias is honored: the kernel writes in place (2 HBM streams).
        input_output_aliases={0: 0},
        compiler_params=pltpu.CompilerParams(
            dimension_semantics=("parallel",),
            vmem_limit_bytes=32 * 1024 * 1024,
        ),
    )(X2, stats)

    return out.reshape(B, C, T)  # free bitcast (output was never padded)


def gwilliams2022_collate(batch, *, brain_resample_rate, baseline_len_sec,
                          clamp, clamp_lim):
    """JAX/Pallas equivalent of Gwilliams2022Collator.forward.

    batch: list of (x:(C,T) f32, y:(F,Ty) f32, subject_idx:int)
    returns (X:(B,C,T) f32, Y:(B,F,Ty) f32, subject_idx:(B,) int32)
    """
    X = jnp.stack([jnp.asarray(item[0], jnp.float32) for item in batch])
    Y = jnp.stack([jnp.asarray(item[1], jnp.float32) for item in batch])
    subject_idx = jnp.asarray([item[2] for item in batch], dtype=jnp.int32)

    baseline_len_samp = int(brain_resample_rate * baseline_len_sec)
    X_out = _baseline_robust_scale(
        X,  # freshly stacked -> safe to donate
        baseline_len_samp=baseline_len_samp,
        clamp=bool(clamp),
        clamp_lim=float(clamp_lim),
        n_tc=_num_tensorcores_per_chip(),
    )
    return X_out, Y, subject_idx


def _reference(X, baseline_len_samp, clamp, clamp_lim):
    """Pure-JAX faithful reference (baseline correction then RobustScaler)."""
    b = jnp.mean(X[:, :, :baseline_len_samp], axis=-1, keepdims=True)
    Xc = X - b
    med = jnp.quantile(Xc, 0.50, axis=-1, keepdims=True)
    q25 = jnp.quantile(Xc, 0.25, axis=-1, keepdims=True)
    q75 = jnp.quantile(Xc, 0.75, axis=-1, keepdims=True)
    scale = q75 - q25
    scale = jnp.where(scale == 0.0, 1.0, scale)
    out = (Xc - med) / scale
    if clamp:
        out = jnp.clip(out, -clamp_lim, clamp_lim)
    return out


if __name__ == "__main__":
    # Deterministic "args.preprocs"
    brain_resample_rate = 128
    baseline_len_sec = 0.25           # -> 32 baseline samples
    clamp = True
    clamp_lim = 5.0

    # Small synthetic batch: 2 items of (MEG chunk, speech embedding, subject id)
    key = jax.random.PRNGKey(0)
    B, C, T = 2, 8, 256               # MEG: channels x time
    F, Ty = 16, 256                   # speech embedding: features x time
    kx, ky = jax.random.split(key)
    Xs = jax.random.normal(kx, (B, C, T), dtype=jnp.float32) * 3.0 + 1.5
    Ys = jax.random.normal(ky, (B, F, Ty), dtype=jnp.float32)
    batch = [(Xs[i], Ys[i], i) for i in range(B)]

    X_out, Y_out, subj_out = gwilliams2022_collate(
        batch,
        brain_resample_rate=brain_resample_rate,
        baseline_len_sec=baseline_len_sec,
        clamp=clamp,
        clamp_lim=clamp_lim,
    )
    jax.block_until_ready((X_out, Y_out, subj_out))

    # sanity check against pure-JAX reference (Xs itself was never donated)
    baseline_len_samp = int(brain_resample_rate * baseline_len_sec)
    ref = _reference(Xs, baseline_len_samp, clamp, clamp_lim)
    assert X_out.shape == (B, C, T) and X_out.dtype == jnp.float32
    assert Y_out.shape == (B, F, Ty)
    assert subj_out.shape == (B,) and subj_out.dtype == jnp.int32
    assert float(jnp.max(jnp.abs(X_out - ref))) < 1e-4, "mismatch vs reference"

    print("KERNEL_OK")
</pallas_src>

<mosaic_0001>
module attributes {stable_mosaic.version = 11 : i64} {
  func.func @_scale_clamp_kernel(%arg0: i32, %arg1: memref<16x256xf32, #tpu.memory_space<vmem>>, %arg2: memref<16x2xf32, #tpu.memory_space<vmem>>, %arg3: memref<16x256xf32, #tpu.memory_space<vmem>>) attributes {dimension_semantics = [#tpu.dimension_semantics<parallel>], iteration_bounds = array<i64: 1>, scalar_prefetch = 0 : i64, scratch_operands = 0 : i64, tpu.core_type = #tpu.core_type<tc>, window_params = [{transform_indices = @transform_0, window_bounds = array<i64: 16, 256>}, {transform_indices = @transform_1, window_bounds = array<i64: 16, 2>}, {transform_indices = @transform_2, window_bounds = array<i64: 16, 256>}]} {
    %c0 = arith.constant 0 : index
    %c0_0 = arith.constant 0 : index
    %0 = vector.load %arg2[%c0, %c0_0] : memref<16x2xf32, #tpu.memory_space<vmem>>, vector<16x1xf32>
    %c0_1 = arith.constant 0 : index
    %c1 = arith.constant 1 : index
    %1 = vector.load %arg2[%c0_1, %c1] : memref<16x2xf32, #tpu.memory_space<vmem>>, vector<16x1xf32>
    %c0_2 = arith.constant 0 : index
    %c0_3 = arith.constant 0 : index
    %2 = vector.load %arg1[%c0_2, %c0_3] : memref<16x256xf32, #tpu.memory_space<vmem>>, vector<16x256xf32>
    %3 = vector.broadcast %0 : vector<16x1xf32> to vector<16x256xf32>
    %4 = arith.subf %2, %3 : vector<16x256xf32>
    %5 = vector.broadcast %1 : vector<16x1xf32> to vector<16x256xf32>
    %6 = arith.mulf %4, %5 : vector<16x256xf32>
    %cst = arith.constant -5.000000e+00 : f32
    %cst_4 = arith.constant 5.000000e+00 : f32
    %7 = vector.broadcast %cst : f32 to vector<16x256xf32>
    %8 = arith.maximumf %7, %6 : vector<16x256xf32>
    %9 = vector.broadcast %cst_4 : f32 to vector<16x256xf32>
    %10 = arith.minimumf %9, %8 : vector<16x256xf32>
    %c0_5 = arith.constant 0 : index
    %c0_6 = arith.constant 0 : index
    %11 = vector.load %arg3[%c0_5, %c0_6] : memref<16x256xf32, #tpu.memory_space<vmem>>, vector<16x256xf32>
    tpu.vector_store %arg3[%c0_5, %c0_6], %10 {strides = array<i32>} : memref<16x256xf32, #tpu.memory_space<vmem>>, vector<16x256xf32>,
    return
  }
  func.func @transform_0(%arg0: i32) -> (i32, i32) {
    %c0_i32 = arith.constant 0 : i32
    %c0_i32_0 = arith.constant 0 : i32
    return %arg0, %c0_i32 : i32, i32
  }
  func.func @transform_1(%arg0: i32) -> (i32, i32) {
    %c0_i32 = arith.constant 0 : i32
    %c0_i32_0 = arith.constant 0 : i32
    return %arg0, %c0_i32 : i32, i32
  }
  func.func @transform_2(%arg0: i32) -> (i32, i32) {
    %c0_i32 = arith.constant 0 : i32
    %c0_i32_0 = arith.constant 0 : i32
    return %arg0, %c0_i32 : i32, i32
  }
}

</mosaic_0001>

<llo_original>
// kernel: _baseline_robust_scale.1
$region0: #{_baseline_robust_scale.1}
  #allocation0 [shape = 'u32[]', space=smem, size = 0x4, offset = 0x4, fixed_abs, tag = 'smem constant byte address 0x4 - core index']
  #allocation1 [shape = 'u32[144,128]{1,0:T(1,128)}', space=vmem, size = 0x12000, scoped, tag = 'internal scratch']
  %s0 = inlined_call_operand.vmem [shape: f32[16,256], index: 0, kind: input, shape index: {}, may-alias: {0,2}]
  %s1 = inlined_call_operand.vmem [shape: f32[16,2], index: 1, kind: input, shape index: {}]
  %s2 = inlined_call_operand.vmem [shape: f32[16,256], index: 2, kind: output, shape index: {}, may-alias: {0,2}]
  %s3 = sld [smem:[#allocation0]]
  $region18: #{_baseline_robust_scale.1} parent=0
    _
  %s5 = ssub.s32 1, %s3
  %s6 = scalar_select 0, %s5, %s3
  // Predicated region
  $region2: #{_baseline_robust_scale.1} parent=0 // pred_check
    _
  $region3: #{_baseline_robust_scale.1} parent=0 // pred_check_branch
    %8 = sbr.rel (0) target = $region5
  $region4: #{_baseline_robust_scale.1} parent=0 // pred_region
    _
  $region5: #{_baseline_robust_scale.1} parent=0 // pred_fallthru
    _
  // Predicated region
  $region6: #{_baseline_robust_scale.1} parent=0 // pred_check
    _
  $region7: #{_baseline_robust_scale.1} parent=0 // pred_check_branch
    %10 = sbr.rel (0) target = $region9
  $region8: #{_baseline_robust_scale.1} parent=0 // pred_region
    _
  $region9: #{_baseline_robust_scale.1} parent=0 // pred_fallthru
    _
  %v11 = vld [vmem:[%s1] sm:$0xff]
  %v12 = vld [vmem:[%s1 + $0x8] sm:$0xff]
  %v13 = vld [vmem:[%s0] sm:$0xff]
  %v14 = vld [vmem:[%s0 + $0x8] sm:$0xff]
  %v15 = vld [vmem:[%s0 + $0x10] sm:$0xff]
  %v16 = vld [vmem:[%s0 + $0x18] sm:$0xff]
  %18 = vset.pattern.permute.xlu0 0
  %19 = vperm.xlu0 %18, %v11
  %v20 = vpop.permute.xlu0 %19
  %23 = vset.pattern.permute.xlu0 0
  %24 = vperm.xlu0 %23, %v12
  %v25 = vpop.permute.xlu0 %24
  %v27 = vsub.f32 %v13, %v20
  %v28 = vsub.f32 %v14, %v20
  %v29 = vsub.f32 %v15, %v25
  %v30 = vsub.f32 %v16, %v25
  %31 = vset.pattern.permute.xlu0 1
  %32 = vperm.xlu0 %31, %v11
  %v33 = vpop.permute.xlu0 %32
  %35 = vset.pattern.permute.xlu0 1
  %36 = vperm.xlu0 %35, %v12
  %v37 = vpop.permute.xlu0 %36
  %v39 = vmul.f32 %v27, %v33
  %v40 = vmul.f32 %v28, %v33
  %v41 = vmul.f32 %v29, %v37
  %v42 = vmul.f32 %v30, %v37
  %v43 = vmax.f32 %v39, -5.0
  %v44 = vmax.f32 %v40, -5.0
  %v45 = vmax.f32 %v41, -5.0
  %v46 = vmax.f32 %v42, -5.0
  %v47 = vmin.f32 %v43, 5.0
  %v48 = vmin.f32 %v44, 5.0
  %v49 = vmin.f32 %v45, 5.0
  %v50 = vmin.f32 %v46, 5.0
  %51 = vst [vmem:[%s2] sm:$0xff] %v47
  %52 = vst [vmem:[%s2 + $0x8] sm:$0xff] %v48
  %53 = vst [vmem:[%s2 + $0x10] sm:$0xff] %v49
  %54 = vst [vmem:[%s2 + $0x18] sm:$0xff] %v50
  // Predicated region
  $region10: #{_baseline_robust_scale.1} parent=0 // pred_check
    _
  $region11: #{_baseline_robust_scale.1} parent=0 // pred_check_branch
    %56 = sbr.rel (0) target = $region13
  $region12: #{_baseline_robust_scale.1} parent=0 // pred_region
    _
  $region13: #{_baseline_robust_scale.1} parent=0 // pred_fallthru
    _
  // Predicated region
  $region14: #{_baseline_robust_scale.1} parent=0 // pred_check
    _
  $region15: #{_baseline_robust_scale.1} parent=0 // pred_check_branch
    %58 = sbr.rel (0) target = $region17
  $region16: #{_baseline_robust_scale.1} parent=0 // pred_region
    _
  $region17: #{_baseline_robust_scale.1} parent=0 // pred_fallthru
    _

</llo_original>
